<compile_context>
chip_gen: v6e
topology: v6e:2x2x1
jax: 0.10.0
libtpu: 0.0.40
codegen_flags: <defaults>
</compile_context>

<pallas_src>
import functools

import jax
import jax.numpy as jnp
from jax.experimental import pallas as pl
from jax.experimental.pallas import tpu as pltpu

LANES = 128
SLAB_ROWS = 264          # 128 (W1) + 128 (W2) + 8 (bias/w3 tail rows, 8-aligned)


def _round_up(n, m):
    return ((n + m - 1) // m) * m


def mlp_kernel(x_ref, p_ref, o_ref):
    hi = jax.lax.Precision.HIGHEST

    x = x_ref[...]                         # (tile, 128), features in cols 0:13
    w1 = p_ref[0:128, :]                   # (128, 128)
    w2 = p_ref[128:256, :]                 # (128, 128)
    tail = p_ref[256:264, :]               # (8, 128) -- 8-row aligned slice
    b1 = tail[0:1, :]                      # (1, 128)
    b2 = tail[1:2, :]                      # (1, 128)
    w3 = tail[2:3, :]                      # (1, 128), w3^T in cols 0:15
    b3 = tail[3:4, :]                      # (1, 128), scalar broadcast over lanes

    # dense1 + ReLU : (tile,128) @ (128,128) -> (tile,128), valid cols 0:10
    h1 = jnp.dot(x, w1, preferred_element_type=jnp.float32, precision=hi)
    h1 = jnp.maximum(h1 + b1, 0.0)

    # dense2 + ReLU : (tile,128) @ (128,128) -> (tile,128), valid cols 0:15
    h2 = jnp.dot(h1, w2, preferred_element_type=jnp.float32, precision=hi)
    h2 = jnp.maximum(h2 + b2, 0.0)

    # dense3 : N=1 output -> VPU multiply + XLU lane reduction instead of MXU dot.
    y = jnp.sum(h2 * w3, axis=-1, keepdims=True)          # (tile, 1)

    # Lane-dense store: every lane carries the scalar result (+ b3).
    o_ref[...] = (jnp.broadcast_to(y, o_ref.shape) + b3).astype(o_ref.dtype)


def _pack_params(params):
    """Pack all 6 parameter arrays into one (264, 128) lane-aligned f32 slab."""
    w1, b1, w2, b2, w3, b3 = params        # w*: (in, out), b*: (1, out)
    P = jnp.zeros((SLAB_ROWS, LANES), jnp.float32)
    P = P.at[0:13, 0:10].set(w1)
    P = P.at[128:138, 0:15].set(w2)
    P = P.at[256, 0:10].set(b1[0])
    P = P.at[257, 0:15].set(b2[0])
    P = P.at[258, 0:15].set(w3[:, 0])
    P = P.at[259, :].set(b3[0, 0])
    return P


@functools.partial(jax.jit, static_argnames=("tile_b",))
def mlp_forward(x, params, *, tile_b=1024):
    B, F = x.shape
    slab = _pack_params(params)

    # Pad batch to the tile size (>= 8 rows); pad features to the 128-lane width.
    b_pad = _round_up(B, 8)
    tile = min(tile_b, b_pad)
    b_pad = _round_up(b_pad, tile)
    x_pad = jnp.zeros((b_pad, LANES), jnp.float32).at[:B, :F].set(x)

    out_pad = pl.pallas_call(
        mlp_kernel,
        out_shape=jax.ShapeDtypeStruct((b_pad, LANES), jnp.float32),
        grid=(b_pad // tile,),
        in_specs=[
            pl.BlockSpec((tile, LANES), lambda i: (i, 0)),       # activations
            pl.BlockSpec((SLAB_ROWS, LANES), lambda i: (0, 0)),  # packed params
        ],
        out_specs=pl.BlockSpec((tile, LANES), lambda i: (i, 0)),
        compiler_params=pltpu.CompilerParams(
            # batch axis is embarrassingly parallel -> 2x on v7x megacore,
            # harmless on single-TC v5e/v6e.
            dimension_semantics=("parallel",),
        ),
    )(x_pad, slab)

    # Lane-dense output slab; the result lives in (any) lane, take column 0.
    return out_pad[:B, 0:1]


def init_params(key):
    # Deterministic synthetic init mimicking PyTorch Linear's U(-1/sqrt(in), 1/sqrt(in)).
    ks = jax.random.split(key, 6)

    def lin(kw, kb, fan_in, fan_out):
        bound = 1.0 / jnp.sqrt(float(fan_in))
        w = jax.random.uniform(kw, (fan_in, fan_out), jnp.float32, -bound, bound)
        b = jax.random.uniform(kb, (1, fan_out), jnp.float32, -bound, bound)
        return w, b

    w1, b1 = lin(ks[0], ks[1], 13, 10)
    w2, b2 = lin(ks[2], ks[3], 10, 15)
    w3, b3 = lin(ks[4], ks[5], 15, 1)
    return (w1, b1, w2, b2, w3, b3)


if __name__ == "__main__":
    key = jax.random.PRNGKey(0)
    kx, kp = jax.random.split(key)
    B = 8
    x = jax.random.normal(kx, (B, 13), dtype=jnp.float32)
    params = init_params(kp)

    out = mlp_forward(x, params)
    jax.block_until_ready(out)

    # Pure-JAX reference of the same forward pass (same pinned precision).
    hi = jax.lax.Precision.HIGHEST
    w1, b1, w2, b2, w3, b3 = params
    ref = jnp.maximum(jnp.dot(x, w1, precision=hi) + b1, 0.0)
    ref = jnp.maximum(jnp.dot(ref, w2, precision=hi) + b2, 0.0)
    ref = jnp.dot(ref, w3, precision=hi) + b3

    assert out.shape == (B, 1)
    assert jnp.allclose(out, ref, atol=1e-5, rtol=1e-5)

    print("KERNEL_OK")
</pallas_src>

<mosaic_0001>
module attributes {stable_mosaic.version = 11 : i64} {
  func.func @mlp_kernel(%arg0: i32, %arg1: memref<8x128xf32, #tpu.memory_space<vmem>>, %arg2: memref<264x128xf32, #tpu.memory_space<vmem>>, %arg3: memref<8x128xf32, #tpu.memory_space<vmem>>) attributes {dimension_semantics = [#tpu.dimension_semantics<parallel>], iteration_bounds = array<i64: 1>, scalar_prefetch = 0 : i64, scratch_operands = 0 : i64, tpu.core_type = #tpu.core_type<tc>, window_params = [{transform_indices = @transform_0, window_bounds = array<i64: 8, 128>}, {pipeline_mode = #tpu.pipeline_mode<synchronous>, transform_indices = @transform_1, window_bounds = array<i64: 264, 128>}, {transform_indices = @transform_2, window_bounds = array<i64: 8, 128>}]} {
    %c0 = arith.constant 0 : index
    %c0_0 = arith.constant 0 : index
    %0 = vector.load %arg1[%c0, %c0_0] : memref<8x128xf32, #tpu.memory_space<vmem>>, vector<8x128xf32>
    %c0_1 = arith.constant 0 : index
    %c0_2 = arith.constant 0 : index
    %1 = vector.load %arg2[%c0_1, %c0_2] : memref<264x128xf32, #tpu.memory_space<vmem>>, vector<128x128xf32>
    %c128 = arith.constant 128 : index
    %c0_3 = arith.constant 0 : index
    %2 = vector.load %arg2[%c128, %c0_3] : memref<264x128xf32, #tpu.memory_space<vmem>>, vector<128x128xf32>
    %c256 = arith.constant 256 : index
    %c0_4 = arith.constant 0 : index
    %3 = vector.load %arg2[%c256, %c0_4] : memref<264x128xf32, #tpu.memory_space<vmem>>, vector<8x128xf32>
    %4 = vector.extract_strided_slice %3 {offsets = [0, 0], sizes = [1, 128], strides = [1, 1]} : vector<8x128xf32> to vector<1x128xf32>
    %5 = vector.extract_strided_slice %3 {offsets = [1, 0], sizes = [1, 128], strides = [1, 1]} : vector<8x128xf32> to vector<1x128xf32>
    %6 = vector.extract_strided_slice %3 {offsets = [2, 0], sizes = [1, 128], strides = [1, 1]} : vector<8x128xf32> to vector<1x128xf32>
    %7 = vector.extract_strided_slice %3 {offsets = [3, 0], sizes = [1, 128], strides = [1, 1]} : vector<8x128xf32> to vector<1x128xf32>
    %cst = arith.constant dense<0.000000e+00> : vector<8x128xf32>
    %8 = tpu.matmul %0, %1, %cst {dimension_numbers = #tpu.dot_dimension_numbers<[1], [0], [0], [1], [0, 0, 1, 1], [], []>, precision = #tpu.contract_precision<fp32>} : vector<8x128xf32>, vector<128x128xf32>, vector<8x128xf32> -> vector<8x128xf32>
    %9 = vector.broadcast %4 : vector<1x128xf32> to vector<8x128xf32>
    %10 = arith.addf %8, %9 : vector<8x128xf32>
    %cst_5 = arith.constant 0.000000e+00 : f32
    %11 = vector.broadcast %cst_5 : f32 to vector<8x128xf32>
    %12 = arith.maximumf %10, %11 : vector<8x128xf32>
    %cst_6 = arith.constant dense<0.000000e+00> : vector<8x128xf32>
    %13 = tpu.matmul %12, %2, %cst_6 {dimension_numbers = #tpu.dot_dimension_numbers<[1], [0], [0], [1], [0, 0, 1, 1], [], []>, precision = #tpu.contract_precision<fp32>} : vector<8x128xf32>, vector<128x128xf32>, vector<8x128xf32> -> vector<8x128xf32>
    %14 = vector.broadcast %5 : vector<1x128xf32> to vector<8x128xf32>
    %15 = arith.addf %13, %14 : vector<8x128xf32>
    %cst_7 = arith.constant 0.000000e+00 : f32
    %16 = vector.broadcast %cst_7 : f32 to vector<8x128xf32>
    %17 = arith.maximumf %15, %16 : vector<8x128xf32>
    %18 = vector.broadcast %6 : vector<1x128xf32> to vector<8x128xf32>
    %19 = arith.mulf %17, %18 : vector<8x128xf32>
    %cst_8 = arith.constant dense<0.000000e+00> : vector<8xf32>
    %20 = vector.multi_reduction <add>, %19, %cst_8 [1] : vector<8x128xf32> to vector<8xf32>
    %21 = vector.shape_cast %20 : vector<8xf32> to vector<8x1xf32>
    %22 = vector.shape_cast %21 : vector<8x1xf32> to vector<8x1xf32>
    %23 = vector.broadcast %22 : vector<8x1xf32> to vector<8x128xf32>
    %24 = vector.broadcast %7 : vector<1x128xf32> to vector<8x128xf32>
    %25 = arith.addf %23, %24 : vector<8x128xf32>
    %c0_9 = arith.constant 0 : index
    %c0_10 = arith.constant 0 : index
    %26 = vector.load %arg3[%c0_9, %c0_10] : memref<8x128xf32, #tpu.memory_space<vmem>>, vector<8x128xf32>
    tpu.vector_store %arg3[%c0_9, %c0_10], %25 {strides = array<i32>} : memref<8x128xf32, #tpu.memory_space<vmem>>, vector<8x128xf32>,
    return
  }
  func.func @transform_0(%arg0: i32) -> (i32, i32) {
    %c0_i32 = arith.constant 0 : i32
    %c0_i32_0 = arith.constant 0 : i32
    return %arg0, %c0_i32 : i32, i32
  }
  func.func @transform_1(%arg0: i32) -> (i32, i32) {
    %c0_i32 = arith.constant 0 : i32
    %c0_i32_0 = arith.constant 0 : i32
    %c0_i32_1 = arith.constant 0 : i32
    return %c0_i32, %c0_i32_0 : i32, i32
  }
  func.func @transform_2(%arg0: i32) -> (i32, i32) {
    %c0_i32 = arith.constant 0 : i32
    %c0_i32_0 = arith.constant 0 : i32
    return %arg0, %c0_i32 : i32, i32
  }
}

</mosaic_0001>

<llo_original>
// kernel: mlp_forward.1
$region0: #{mlp_forward.1}
  #allocation0 [shape = 'u32[]', space=smem, size = 0x4, offset = 0x4, fixed_abs, tag = 'smem constant byte address 0x4 - core index']
  #allocation1 [shape = 'u32[144,128]{1,0:T(1,128)}', space=vmem, size = 0x12000, scoped, tag = 'internal scratch']
  %s0 = inlined_call_operand.vmem [shape: f32[8,128], index: 0, kind: input, shape index: {}]
  %s1 = inlined_call_operand.vmem [shape: f32[264,128], index: 1, kind: input, shape index: {}]
  %s2 = inlined_call_operand.vmem [shape: f32[8,128], index: 2, kind: output, shape index: {}]
  %s3 = sld [smem:[#allocation0]]
  $region18: #{mlp_forward.1} parent=0
    _
  %s5 = ssub.s32 1, %s3
  %s6 = scalar_select 0, %s5, %s3
  // Predicated region
  $region2: #{mlp_forward.1} parent=0 // pred_check
    _
  $region3: #{mlp_forward.1} parent=0 // pred_check_branch
    %8 = sbr.rel (0) target = $region5
  $region4: #{mlp_forward.1} parent=0 // pred_region
    _
  $region5: #{mlp_forward.1} parent=0 // pred_fallthru
    _
  // Predicated region
  $region6: #{mlp_forward.1} parent=0 // pred_check
    _
  $region7: #{mlp_forward.1} parent=0 // pred_check_branch
    %10 = sbr.rel (0) target = $region9
  $region8: #{mlp_forward.1} parent=0 // pred_region
    _
  $region9: #{mlp_forward.1} parent=0 // pred_fallthru
    _
  %v11 = vld [vmem:[%s0] sm:$0xff]
  %v12 = vld [vmem:[%s1] sm:$0xff]
  %v13 = vld [vmem:[%s1 + $0x8] sm:$0xff]
  %v14 = vld [vmem:[%s1 + $0x10] sm:$0xff]
  %v15 = vld [vmem:[%s1 + $0x18] sm:$0xff]
  %v16 = vld [vmem:[%s1 + $0x20] sm:$0xff]
  %v17 = vld [vmem:[%s1 + $0x28] sm:$0xff]
  %v18 = vld [vmem:[%s1 + $0x30] sm:$0xff]
  %v19 = vld [vmem:[%s1 + $0x38] sm:$0xff]
  %v20 = vld [vmem:[%s1 + $0x40] sm:$0xff]
  %v21 = vld [vmem:[%s1 + $0x48] sm:$0xff]
  %v22 = vld [vmem:[%s1 + $0x50] sm:$0xff]
  %v23 = vld [vmem:[%s1 + $0x58] sm:$0xff]
  %v24 = vld [vmem:[%s1 + $0x60] sm:$0xff]
  %v25 = vld [vmem:[%s1 + $0x68] sm:$0xff]
  %v26 = vld [vmem:[%s1 + $0x70] sm:$0xff]
  %v27 = vld [vmem:[%s1 + $0x78] sm:$0xff]
  %v28 = vld [vmem:[%s1 + $0x80] sm:$0xff]
  %v29 = vld [vmem:[%s1 + $0x88] sm:$0xff]
  %v30 = vld [vmem:[%s1 + $0x90] sm:$0xff]
  %v31 = vld [vmem:[%s1 + $0x98] sm:$0xff]
  %v32 = vld [vmem:[%s1 + $0xa0] sm:$0xff]
  %v33 = vld [vmem:[%s1 + $0xa8] sm:$0xff]
  %v34 = vld [vmem:[%s1 + $0xb0] sm:$0xff]
  %v35 = vld [vmem:[%s1 + $0xb8] sm:$0xff]
  %v36 = vld [vmem:[%s1 + $0xc0] sm:$0xff]
  %v37 = vld [vmem:[%s1 + $0xc8] sm:$0xff]
  %v38 = vld [vmem:[%s1 + $0xd0] sm:$0xff]
  %v39 = vld [vmem:[%s1 + $0xd8] sm:$0xff]
  %v40 = vld [vmem:[%s1 + $0xe0] sm:$0xff]
  %v41 = vld [vmem:[%s1 + $0xe8] sm:$0xff]
  %v42 = vld [vmem:[%s1 + $0xf0] sm:$0xff]
  %v43 = vld [vmem:[%s1 + $0xf8] sm:$0xff]
  %v44 = vld [vmem:[%s1 + $0x100] sm:$0xff]
  %v45 = vlaneseq
  %v46 = vshrl.u32 %v45, 7
  %v47 = vsub.s32 0, %v46
  %v48 = vrot.slane %v44, %v47
  %49 = vmatprep.subr.mxu0 0.0
  %v50 = vand.u32 %v27, 4294901760
  %51 = vmatpush1.msra.mxu0 %v50
  %52 = vmatprep.subr.mxu0 0.0
  %v53 = vand.u32 %v26, 4294901760
  %54 = vmatpush1.msra.mxu0 %v53
  %55 = vmatprep.subr.mxu0 0.0
  %v56 = vand.u32 %v25, 4294901760
  %57 = vmatpush1.msra.mxu0 %v56
  %58 = vmatprep.subr.mxu0 0.0
  %v59 = vand.u32 %v24, 4294901760
  %60 = vmatpush1.msra.mxu0 %v59
  %61 = vmatprep.subr.mxu0 0.0
  %v62 = vand.u32 %v23, 4294901760
  %63 = vmatpush1.msra.mxu0 %v62
  %64 = vmatprep.subr.mxu0 0.0
  %v65 = vand.u32 %v22, 4294901760
  %66 = vmatpush1.msra.mxu0 %v65
  %67 = vmatprep.subr.mxu0 0.0
  %v68 = vand.u32 %v21, 4294901760
  %69 = vmatpush1.msra.mxu0 %v68
  %70 = vmatprep.subr.mxu0 0.0
  %v71 = vand.u32 %v20, 4294901760
  %72 = vmatpush1.msra.mxu0 %v71
  %73 = vmatprep.subr.mxu0 0.0
  %v74 = vand.u32 %v19, 4294901760
  %75 = vmatpush1.msra.mxu0 %v74
  %76 = vmatprep.subr.mxu0 0.0
  %v77 = vand.u32 %v18, 4294901760
  %78 = vmatpush1.msra.mxu0 %v77
  %79 = vmatprep.subr.mxu0 0.0
  %v80 = vand.u32 %v17, 4294901760
  %81 = vmatpush1.msra.mxu0 %v80
  %82 = vmatprep.subr.mxu0 0.0
  %v83 = vand.u32 %v16, 4294901760
  %84 = vmatpush1.msra.mxu0 %v83
  %85 = vmatprep.subr.mxu0 0.0
  %v86 = vand.u32 %v15, 4294901760
  %87 = vmatpush1.msra.mxu0 %v86
  %88 = vmatprep.subr.mxu0 0.0
  %v89 = vand.u32 %v14, 4294901760
  %90 = vmatpush1.msra.mxu0 %v89
  %91 = vmatprep.subr.mxu0 0.0
  %v92 = vand.u32 %v13, 4294901760
  %93 = vmatpush1.msra.mxu0 %v92
  %94 = vmatprep.subr.mxu0 0.0
  %v95 = vand.u32 %v12, 4294901760
  %96 = vmatpush1.msra.mxu0 %v95
  %97 = vmatprep.subr.mxu0 0.0
  %98 = vmatpush2.msra.mxu0 0.0
  %99 = vmatprep.subr.mxu0 0.0
  %100 = vmatpush2.msra.mxu0 0.0
  %101 = vmatprep.subr.mxu0 0.0
  %102 = vmatpush2.msra.mxu0 0.0
  %103 = vmatprep.subr.mxu0 0.0
  %104 = vmatpush2.msra.mxu0 0.0
  %105 = vmatprep.subr.mxu0 0.0
  %106 = vmatpush2.msra.mxu0 0.0
  %107 = vmatprep.subr.mxu0 0.0
  %108 = vmatpush2.msra.mxu0 0.0
  %109 = vmatprep.subr.mxu0 0.0
  %110 = vmatpush2.msra.mxu0 0.0
  %111 = vmatprep.subr.mxu0 0.0
  %112 = vmatpush2.msra.mxu0 0.0
  %113 = vmatprep.subr.mxu0 0.0
  %114 = vmatpush2.msra.mxu0 0.0
  %115 = vmatprep.subr.mxu0 0.0
  %116 = vmatpush2.msra.mxu0 0.0
  %117 = vmatprep.subr.mxu0 0.0
  %118 = vmatpush2.msra.mxu0 0.0
  %119 = vmatprep.subr.mxu0 0.0
  %120 = vmatpush2.msra.mxu0 0.0
  %121 = vmatprep.subr.mxu0 0.0
  %122 = vmatpush2.msra.mxu0 0.0
  %123 = vmatprep.subr.mxu0 0.0
  %124 = vmatpush2.msra.mxu0 0.0
  %125 = vmatprep.subr.mxu0 0.0
  %126 = vmatpush2.msra.mxu0 0.0
  %127 = vmatprep.subr.mxu0 0.0
  %128 = vmatpush2.msra.mxu0 0.0
  %129 = vmatprep.mubr.f32.mxu0 0.0
  %v130 = vand.u32 %v11, 4294901760
  %v131 = vsub.f32 %v11, %v130
  %v132 = vand.u32 %v131, 4294901760
  %v133 = vsub.f32 %v131, %v132
  %v134 = vand.u32 %v133, 4294901760
  %135 = vmatmul.mubr.f32.gmra.mxu0 %v134
  %v136 = vpop.f32.mrf.mxu0
  %v137 = vadd.f32 %v48, %v136
  %v138 = vpop.f32.mrf.mxu0
  %139 = vdwg.mxu0
  %140 = vmatprep.subr.mxu0 0.0
  %v141 = vand.u32 %v27, 4294901760
  %v142 = vsub.f32 %v27, %v141
  %v143 = vand.u32 %v142, 4294901760
  %v144 = vsub.f32 %v142, %v143
  %v145 = vand.u32 %v144, 4294901760
  %146 = vmatpush1.msra.mxu0 %v145
  %147 = vmatprep.subr.mxu0 0.0
  %v148 = vand.u32 %v26, 4294901760
  %v149 = vsub.f32 %v26, %v148
  %v150 = vand.u32 %v149, 4294901760
  %v151 = vsub.f32 %v149, %v150
  %v152 = vand.u32 %v151, 4294901760
  %153 = vmatpush1.msra.mxu0 %v152
  %154 = vmatprep.subr.mxu0 0.0
  %v155 = vand.u32 %v25, 4294901760
  %v156 = vsub.f32 %v25, %v155
  %v157 = vand.u32 %v156, 4294901760
  %v158 = vsub.f32 %v156, %v157
  %v159 = vand.u32 %v158, 4294901760
  %160 = vmatpush1.msra.mxu0 %v159
  %161 = vmatprep.subr.mxu0 0.0
  %v162 = vand.u32 %v24, 4294901760
  %v163 = vsub.f32 %v24, %v162
  %v164 = vand.u32 %v163, 4294901760
  %v165 = vsub.f32 %v163, %v164
  %v166 = vand.u32 %v165, 4294901760
  %167 = vmatpush1.msra.mxu0 %v166
  %168 = vmatprep.subr.mxu0 0.0
  %v169 = vand.u32 %v23, 4294901760
  %v170 = vsub.f32 %v23, %v169
  %v171 = vand.u32 %v170, 4294901760
  %v172 = vsub.f32 %v170, %v171
  %v173 = vand.u32 %v172, 4294901760
  %174 = vmatpush1.msra.mxu0 %v173
  %175 = vmatprep.subr.mxu0 0.0
  %v176 = vand.u32 %v22, 4294901760
  %v177 = vsub.f32 %v22, %v176
  %v178 = vand.u32 %v177, 4294901760
  %v179 = vsub.f32 %v177, %v178
  %v180 = vand.u32 %v179, 4294901760
  %181 = vmatpush1.msra.mxu0 %v180
  %182 = vmatprep.subr.mxu0 0.0
  %v183 = vand.u32 %v21, 4294901760
  %v184 = vsub.f32 %v21, %v183
  %v185 = vand.u32 %v184, 4294901760
  %v186 = vsub.f32 %v184, %v185
  %v187 = vand.u32 %v186, 4294901760
  %188 = vmatpush1.msra.mxu0 %v187
  %189 = vmatprep.subr.mxu0 0.0
  %v190 = vand.u32 %v20, 4294901760
  %v191 = vsub.f32 %v20, %v190
  %v192 = vand.u32 %v191, 4294901760
  %v193 = vsub.f32 %v191, %v192
  %v194 = vand.u32 %v193, 4294901760
  %195 = vmatpush1.msra.mxu0 %v194
  %196 = vmatprep.subr.mxu0 0.0
  %v197 = vand.u32 %v19, 4294901760
  %v198 = vsub.f32 %v19, %v197
  %v199 = vand.u32 %v198, 4294901760
  %v200 = vsub.f32 %v198, %v199
  %v201 = vand.u32 %v200, 4294901760
  %202 = vmatpush1.msra.mxu0 %v201
  %203 = vmatprep.subr.mxu0 0.0
  %v204 = vand.u32 %v18, 4294901760
  %v205 = vsub.f32 %v18, %v204
  %v206 = vand.u32 %v205, 4294901760
  %v207 = vsub.f32 %v205, %v206
  %v208 = vand.u32 %v207, 4294901760
  %209 = vmatpush1.msra.mxu0 %v208
  %210 = vmatprep.subr.mxu0 0.0
  %v211 = vand.u32 %v17, 4294901760
  %v212 = vsub.f32 %v17, %v211
  %v213 = vand.u32 %v212, 4294901760
  %v214 = vsub.f32 %v212, %v213
  %v215 = vand.u32 %v214, 4294901760
  %216 = vmatpush1.msra.mxu0 %v215
  %217 = vmatprep.subr.mxu0 0.0
  %v218 = vand.u32 %v16, 4294901760
  %v219 = vsub.f32 %v16, %v218
  %v220 = vand.u32 %v219, 4294901760
  %v221 = vsub.f32 %v219, %v220
  %v222 = vand.u32 %v221, 4294901760
  %223 = vmatpush1.msra.mxu0 %v222
  %224 = vmatprep.subr.mxu0 0.0
  %v225 = vand.u32 %v15, 4294901760
  %v226 = vsub.f32 %v15, %v225
  %v227 = vand.u32 %v226, 4294901760
  %v228 = vsub.f32 %v226, %v227
  %v229 = vand.u32 %v228, 4294901760
  %230 = vmatpush1.msra.mxu0 %v229
  %231 = vmatprep.subr.mxu0 0.0
  %v232 = vand.u32 %v14, 4294901760
  %v233 = vsub.f32 %v14, %v232
  %v234 = vand.u32 %v233, 4294901760
  %v235 = vsub.f32 %v233, %v234
  %v236 = vand.u32 %v235, 4294901760
  %237 = vmatpush1.msra.mxu0 %v236
  %238 = vmatprep.subr.mxu0 0.0
  %v239 = vand.u32 %v13, 4294901760
  %v240 = vsub.f32 %v13, %v239
  %v241 = vand.u32 %v240, 4294901760
  %v242 = vsub.f32 %v240, %v241
  %v243 = vand.u32 %v242, 4294901760
  %244 = vmatpush1.msra.mxu0 %v243
  %245 = vmatprep.subr.mxu0 0.0
  %v246 = vand.u32 %v12, 4294901760
  %v247 = vsub.f32 %v12, %v246
  %v248 = vand.u32 %v247, 4294901760
  %v249 = vsub.f32 %v247, %v248
  %v250 = vand.u32 %v249, 4294901760
  %251 = vmatpush1.msra.mxu0 %v250
  %252 = vmatprep.subr.mxu0 0.0
  %253 = vmatpush2.msra.mxu0 0.0
  %254 = vmatprep.subr.mxu0 0.0
  %255 = vmatpush2.msra.mxu0 0.0
  %256 = vmatprep.subr.mxu0 0.0
  %257 = vmatpush2.msra.mxu0 0.0
  %258 = vmatprep.subr.mxu0 0.0
  %259 = vmatpush2.msra.mxu0 0.0
  %260 = vmatprep.subr.mxu0 0.0
  %261 = vmatpush2.msra.mxu0 0.0
  %262 = vmatprep.subr.mxu0 0.0
  %263 = vmatpush2.msra.mxu0 0.0
  %264 = vmatprep.subr.mxu0 0.0
  %265 = vmatpush2.msra.mxu0 0.0
  %266 = vmatprep.subr.mxu0 0.0
  %267 = vmatpush2.msra.mxu0 0.0
  %268 = vmatprep.subr.mxu0 0.0
  %269 = vmatpush2.msra.mxu0 0.0
  %270 = vmatprep.subr.mxu0 0.0
  %271 = vmatpush2.msra.mxu0 0.0
  %272 = vmatprep.subr.mxu0 0.0
  %273 = vmatpush2.msra.mxu0 0.0
  %274 = vmatprep.subr.mxu0 0.0
  %275 = vmatpush2.msra.mxu0 0.0
  %276 = vmatprep.subr.mxu0 0.0
  %277 = vmatpush2.msra.mxu0 0.0
  %278 = vmatprep.subr.mxu0 0.0
  %279 = vmatpush2.msra.mxu0 0.0
  %280 = vmatprep.subr.mxu0 0.0
  %281 = vmatpush2.msra.mxu0 0.0
  %282 = vmatprep.subr.mxu0 0.0
  %283 = vmatpush2.msra.mxu0 0.0
  %284 = vmatprep.mubr.f32.mxu0 0.0
  %v285 = vand.u32 %v11, 4294901760
  %286 = vmatmul.mubr.f32.gmra.mxu0 %v285
  %v287 = vpop.f32.mrf.mxu0
  %v288 = vadd.f32 %v137, %v287
  %v289 = vpop.f32.mrf.mxu0
  %290 = vdwg.mxu0
  %291 = vmatprep.subr.mxu0 0.0
  %v292 = vand.u32 %v27, 4294901760
  %v293 = vsub.f32 %v27, %v292
  %294 = vmatpush1.msra.mxu0 %v293
  %295 = vmatprep.subr.mxu0 0.0
  %v296 = vand.u32 %v26, 4294901760
  %v297 = vsub.f32 %v26, %v296
  %298 = vmatpush1.msra.mxu0 %v297
  %299 = vmatprep.subr.mxu0 0.0
  %v300 = vand.u32 %v25, 4294901760
  %v301 = vsub.f32 %v25, %v300
  %302 = vmatpush1.msra.mxu0 %v301
  %303 = vmatprep.subr.mxu0 0.0
  %v304 = vand.u32 %v24, 4294901760
  %v305 = vsub.f32 %v24, %v304
  %306 = vmatpush1.msra.mxu0 %v305
  %307 = vmatprep.subr.mxu0 0.0
  %v308 = vand.u32 %v23, 4294901760
  %v309 = vsub.f32 %v23, %v308
  %310 = vmatpush1.msra.mxu0 %v309
  %311 = vmatprep.subr.mxu0 0.0
  %v312 = vand.u32 %v22, 4294901760
  %v313 = vsub.f32 %v22, %v312
  %314 = vmatpush1.msra.mxu0 %v313
  %315 = vmatprep.subr.mxu0 0.0
  %v316 = vand.u32 %v21, 4294901760
  %v317 = vsub.f32 %v21, %v316
  %318 = vmatpush1.msra.mxu0 %v317
  %319 = vmatprep.subr.mxu0 0.0
  %v320 = vand.u32 %v20, 4294901760
  %v321 = vsub.f32 %v20, %v320
  %322 = vmatpush1.msra.mxu0 %v321
  %323 = vmatprep.subr.mxu0 0.0
  %v324 = vand.u32 %v19, 4294901760
  %v325 = vsub.f32 %v19, %v324
  %326 = vmatpush1.msra.mxu0 %v325
  %327 = vmatprep.subr.mxu0 0.0
  %v328 = vand.u32 %v18, 4294901760
  %v329 = vsub.f32 %v18, %v328
  %330 = vmatpush1.msra.mxu0 %v329
  %331 = vmatprep.subr.mxu0 0.0
  %v332 = vand.u32 %v17, 4294901760
  %v333 = vsub.f32 %v17, %v332
  %334 = vmatpush1.msra.mxu0 %v333
  %335 = vmatprep.subr.mxu0 0.0
  %v336 = vand.u32 %v16, 4294901760
  %v337 = vsub.f32 %v16, %v336
  %338 = vmatpush1.msra.mxu0 %v337
  %339 = vmatprep.subr.mxu0 0.0
  %v340 = vand.u32 %v15, 4294901760
  %v341 = vsub.f32 %v15, %v340
  %342 = vmatpush1.msra.mxu0 %v341
  %343 = vmatprep.subr.mxu0 0.0
  %v344 = vand.u32 %v14, 4294901760
  %v345 = vsub.f32 %v14, %v344
  %346 = vmatpush1.msra.mxu0 %v345
  %347 = vmatprep.subr.mxu0 0.0
  %v348 = vand.u32 %v13, 4294901760
  %v349 = vsub.f32 %v13, %v348
  %350 = vmatpush1.msra.mxu0 %v349
  %351 = vmatprep.subr.mxu0 0.0
  %v352 = vand.u32 %v12, 4294901760
  %v353 = vsub.f32 %v12, %v352
  %354 = vmatpush1.msra.mxu0 %v353
  %355 = vmatprep.subr.mxu0 0.0
  %356 = vmatpush2.msra.mxu0 0.0
  %357 = vmatprep.subr.mxu0 0.0
  %358 = vmatpush2.msra.mxu0 0.0
  %359 = vmatprep.subr.mxu0 0.0
  %360 = vmatpush2.msra.mxu0 0.0
  %361 = vmatprep.subr.mxu0 0.0
  %362 = vmatpush2.msra.mxu0 0.0
  %363 = vmatprep.subr.mxu0 0.0
  %364 = vmatpush2.msra.mxu0 0.0
  %365 = vmatprep.subr.mxu0 0.0
  %366 = vmatpush2.msra.mxu0 0.0
  %367 = vmatprep.subr.mxu0 0.0
  %368 = vmatpush2.msra.mxu0 0.0
  %369 = vmatprep.subr.mxu0 0.0
  %370 = vmatpush2.msra.mxu0 0.0
  %371 = vmatprep.subr.mxu0 0.0
  %372 = vmatpush2.msra.mxu0 0.0
  %373 = vmatprep.subr.mxu0 0.0
  %374 = vmatpush2.msra.mxu0 0.0
  %375 = vmatprep.subr.mxu0 0.0
  %376 = vmatpush2.msra.mxu0 0.0
  %377 = vmatprep.subr.mxu0 0.0
  %378 = vmatpush2.msra.mxu0 0.0
  %379 = vmatprep.subr.mxu0 0.0
  %380 = vmatpush2.msra.mxu0 0.0
  %381 = vmatprep.subr.mxu0 0.0
  %382 = vmatpush2.msra.mxu0 0.0
  %383 = vmatprep.subr.mxu0 0.0
  %384 = vmatpush2.msra.mxu0 0.0
  %385 = vmatprep.subr.mxu0 0.0
  %386 = vmatpush2.msra.mxu0 0.0
  %387 = vmatprep.mubr.f32.mxu0 0.0
  %v388 = vand.u32 %v11, 4294901760
  %v389 = vsub.f32 %v11, %v388
  %390 = vmatmul.mubr.f32.gmra.mxu0 %v389
  %v391 = vpop.f32.mrf.mxu0
  %v392 = vadd.f32 %v288, %v391
  %v393 = vpop.f32.mrf.mxu0
  %394 = vdwg.mxu0
  %395 = vmatprep.subr.mxu0 0.0
  %v396 = vand.u32 %v27, 4294901760
  %397 = vmatpush1.msra.mxu0 %v396
  %398 = vmatprep.subr.mxu0 0.0
  %v399 = vand.u32 %v26, 4294901760
  %400 = vmatpush1.msra.mxu0 %v399
  %401 = vmatprep.subr.mxu0 0.0
  %v402 = vand.u32 %v25, 4294901760
  %403 = vmatpush1.msra.mxu0 %v402
  %404 = vmatprep.subr.mxu0 0.0
  %v405 = vand.u32 %v24, 4294901760
  %406 = vmatpush1.msra.mxu0 %v405
  %407 = vmatprep.subr.mxu0 0.0
  %v408 = vand.u32 %v23, 4294901760
  %409 = vmatpush1.msra.mxu0 %v408
  %410 = vmatprep.subr.mxu0 0.0
  %v411 = vand.u32 %v22, 4294901760
  %412 = vmatpush1.msra.mxu0 %v411
  %413 = vmatprep.subr.mxu0 0.0
  %v414 = vand.u32 %v21, 4294901760
  %415 = vmatpush1.msra.mxu0 %v414
  %416 = vmatprep.subr.mxu0 0.0
  %v417 = vand.u32 %v20, 4294901760
  %418 = vmatpush1.msra.mxu0 %v417
  %419 = vmatprep.subr.mxu0 0.0
  %v420 = vand.u32 %v19, 4294901760
  %421 = vmatpush1.msra.mxu0 %v420
  %422 = vmatprep.subr.mxu0 0.0
  %v423 = vand.u32 %v18, 4294901760
  %424 = vmatpush1.msra.mxu0 %v423
  %425 = vmatprep.subr.mxu0 0.0
  %v426 = vand.u32 %v17, 4294901760
  %427 = vmatpush1.msra.mxu0 %v426
  %428 = vmatprep.subr.mxu0 0.0
  %v429 = vand.u32 %v16, 4294901760
  %430 = vmatpush1.msra.mxu0 %v429
  %431 = vmatprep.subr.mxu0 0.0
  %v432 = vand.u32 %v15, 4294901760
  %433 = vmatpush1.msra.mxu0 %v432
  %434 = vmatprep.subr.mxu0 0.0
  %v435 = vand.u32 %v14, 4294901760
  %436 = vmatpush1.msra.mxu0 %v435
  %437 = vmatprep.subr.mxu0 0.0
  %v438 = vand.u32 %v13, 4294901760
  %439 = vmatpush1.msra.mxu0 %v438
  %440 = vmatprep.subr.mxu0 0.0
  %v441 = vand.u32 %v12, 4294901760
  %442 = vmatpush1.msra.mxu0 %v441
  %443 = vmatprep.subr.mxu0 0.0
  %444 = vmatpush2.msra.mxu0 0.0
  %445 = vmatprep.subr.mxu0 0.0
  %446 = vmatpush2.msra.mxu0 0.0
  %447 = vmatprep.subr.mxu0 0.0
  %448 = vmatpush2.msra.mxu0 0.0
  %449 = vmatprep.subr.mxu0 0.0
  %450 = vmatpush2.msra.mxu0 0.0
  %451 = vmatprep.subr.mxu0 0.0
  %452 = vmatpush2.msra.mxu0 0.0
  %453 = vmatprep.subr.mxu0 0.0
  %454 = vmatpush2.msra.mxu0 0.0
  %455 = vmatprep.subr.mxu0 0.0
  %456 = vmatpush2.msra.mxu0 0.0
  %457 = vmatprep.subr.mxu0 0.0
  %458 = vmatpush2.msra.mxu0 0.0
  %459 = vmatprep.subr.mxu0 0.0
  %460 = vmatpush2.msra.mxu0 0.0
  %461 = vmatprep.subr.mxu0 0.0
  %462 = vmatpush2.msra.mxu0 0.0
  %463 = vmatprep.subr.mxu0 0.0
  %464 = vmatpush2.msra.mxu0 0.0
  %465 = vmatprep.subr.mxu0 0.0
  %466 = vmatpush2.msra.mxu0 0.0
  %467 = vmatprep.subr.mxu0 0.0
  %468 = vmatpush2.msra.mxu0 0.0
  %469 = vmatprep.subr.mxu0 0.0
  %470 = vmatpush2.msra.mxu0 0.0
  %471 = vmatprep.subr.mxu0 0.0
  %472 = vmatpush2.msra.mxu0 0.0
  %473 = vmatprep.subr.mxu0 0.0
  %474 = vmatpush2.msra.mxu0 0.0
  %475 = vmatprep.mubr.f32.mxu0 0.0
  %v476 = vand.u32 %v11, 4294901760
  %v477 = vsub.f32 %v11, %v476
  %v478 = vand.u32 %v477, 4294901760
  %479 = vmatmul.mubr.f32.gmra.mxu0 %v478
  %v480 = vpop.f32.mrf.mxu0
  %v481 = vadd.f32 %v392, %v480
  %v482 = vpop.f32.mrf.mxu0
  %483 = vdwg.mxu0
  %484 = vmatprep.subr.mxu0 0.0
  %v485 = vand.u32 %v27, 4294901760
  %v486 = vsub.f32 %v27, %v485
  %v487 = vand.u32 %v486, 4294901760
  %488 = vmatpush1.msra.mxu0 %v487
  %489 = vmatprep.subr.mxu0 0.0
  %v490 = vand.u32 %v26, 4294901760
  %v491 = vsub.f32 %v26, %v490
  %v492 = vand.u32 %v491, 4294901760
  %493 = vmatpush1.msra.mxu0 %v492
  %494 = vmatprep.subr.mxu0 0.0
  %v495 = vand.u32 %v25, 4294901760
  %v496 = vsub.f32 %v25, %v495
  %v497 = vand.u32 %v496, 4294901760
  %498 = vmatpush1.msra.mxu0 %v497
  %499 = vmatprep.subr.mxu0 0.0
  %v500 = vand.u32 %v24, 4294901760
  %v501 = vsub.f32 %v24, %v500
  %v502 = vand.u32 %v501, 4294901760
  %503 = vmatpush1.msra.mxu0 %v502
  %504 = vmatprep.subr.mxu0 0.0
  %v505 = vand.u32 %v23, 4294901760
  %v506 = vsub.f32 %v23, %v505
  %v507 = vand.u32 %v506, 4294901760
  %508 = vmatpush1.msra.mxu0 %v507
  %509 = vmatprep.subr.mxu0 0.0
  %v510 = vand.u32 %v22, 4294901760
  %v511 = vsub.f32 %v22, %v510
  %v512 = vand.u32 %v511, 4294901760
  %513 = vmatpush1.msra.mxu0 %v512
  %514 = vmatprep.subr.mxu0 0.0
  %v515 = vand.u32 %v21, 4294901760
  %v516 = vsub.f32 %v21, %v515
  %v517 = vand.u32 %v516, 4294901760
  %518 = vmatpush1.msra.mxu0 %v517
  %519 = vmatprep.subr.mxu0 0.0
  %v520 = vand.u32 %v20, 4294901760
  %v521 = vsub.f32 %v20, %v520
  %v522 = vand.u32 %v521, 4294901760
  %523 = vmatpush1.msra.mxu0 %v522
  %524 = vmatprep.subr.mxu0 0.0
  %v525 = vand.u32 %v19, 4294901760
  %v526 = vsub.f32 %v19, %v525
  %v527 = vand.u32 %v526, 4294901760
  %528 = vmatpush1.msra.mxu0 %v527
  %529 = vmatprep.subr.mxu0 0.0
  %v530 = vand.u32 %v18, 4294901760
  %v531 = vsub.f32 %v18, %v530
  %v532 = vand.u32 %v531, 4294901760
  %533 = vmatpush1.msra.mxu0 %v532
  %534 = vmatprep.subr.mxu0 0.0
  %v535 = vand.u32 %v17, 4294901760
  %v536 = vsub.f32 %v17, %v535
  %v537 = vand.u32 %v536, 4294901760
  %538 = vmatpush1.msra.mxu0 %v537
  %539 = vmatprep.subr.mxu0 0.0
  %v540 = vand.u32 %v16, 4294901760
  %v541 = vsub.f32 %v16, %v540
  %v542 = vand.u32 %v541, 4294901760
  %543 = vmatpush1.msra.mxu0 %v542
  %544 = vmatprep.subr.mxu0 0.0
  %v545 = vand.u32 %v15, 4294901760
  %v546 = vsub.f32 %v15, %v545
  %v547 = vand.u32 %v546, 4294901760
  %548 = vmatpush1.msra.mxu0 %v547
  %549 = vmatprep.subr.mxu0 0.0
  %v550 = vand.u32 %v14, 4294901760
  %v551 = vsub.f32 %v14, %v550
  %v552 = vand.u32 %v551, 4294901760
  %553 = vmatpush1.msra.mxu0 %v552
  %554 = vmatprep.subr.mxu0 0.0
  %v555 = vand.u32 %v13, 4294901760
  %v556 = vsub.f32 %v13, %v555
  %v557 = vand.u32 %v556, 4294901760
  %558 = vmatpush1.msra.mxu0 %v557
  %559 = vmatprep.subr.mxu0 0.0
  %v560 = vand.u32 %v12, 4294901760
  %v561 = vsub.f32 %v12, %v560
  %v562 = vand.u32 %v561, 4294901760
  %563 = vmatpush1.msra.mxu0 %v562
  %564 = vmatprep.subr.mxu0 0.0
  %565 = vmatpush2.msra.mxu0 0.0
  %566 = vmatprep.subr.mxu0 0.0
  %567 = vmatpush2.msra.mxu0 0.0
  %568 = vmatprep.subr.mxu0 0.0
  %569 = vmatpush2.msra.mxu0 0.0
  %570 = vmatprep.subr.mxu0 0.0
  %571 = vmatpush2.msra.mxu0 0.0
  %572 = vmatprep.subr.mxu0 0.0
  %573 = vmatpush2.msra.mxu0 0.0
  %574 = vmatprep.subr.mxu0 0.0
  %575 = vmatpush2.msra.mxu0 0.0
  %576 = vmatprep.subr.mxu0 0.0
  %577 = vmatpush2.msra.mxu0 0.0
  %578 = vmatprep.subr.mxu0 0.0
  %579 = vmatpush2.msra.mxu0 0.0
  %580 = vmatprep.subr.mxu0 0.0
  %581 = vmatpush2.msra.mxu0 0.0
  %582 = vmatprep.subr.mxu0 0.0
  %583 = vmatpush2.msra.mxu0 0.0
  %584 = vmatprep.subr.mxu0 0.0
  %585 = vmatpush2.msra.mxu0 0.0
  %586 = vmatprep.subr.mxu0 0.0
  %587 = vmatpush2.msra.mxu0 0.0
  %588 = vmatprep.subr.mxu0 0.0
  %589 = vmatpush2.msra.mxu0 0.0
  %590 = vmatprep.subr.mxu0 0.0
  %591 = vmatpush2.msra.mxu0 0.0
  %592 = vmatprep.subr.mxu0 0.0
  %593 = vmatpush2.msra.mxu0 0.0
  %594 = vmatprep.subr.mxu0 0.0
  %595 = vmatpush2.msra.mxu0 0.0
  %596 = vmatprep.mubr.f32.mxu0 0.0
  %v597 = vand.u32 %v11, 4294901760
  %598 = vmatmul.mubr.f32.gmra.mxu0 %v597
  %v599 = vpop.f32.mrf.mxu0
  %v600 = vadd.f32 %v481, %v599
  %v601 = vpop.f32.mrf.mxu0
  %602 = vdwg.mxu0
  %603 = vmatprep.subr.mxu0 0.0
  %v604 = vand.u32 %v27, 4294901760
  %605 = vmatpush1.msra.mxu0 %v604
  %606 = vmatprep.subr.mxu0 0.0
  %v607 = vand.u32 %v26, 4294901760
  %608 = vmatpush1.msra.mxu0 %v607
  %609 = vmatprep.subr.mxu0 0.0
  %v610 = vand.u32 %v25, 4294901760
  %611 = vmatpush1.msra.mxu0 %v610
  %612 = vmatprep.subr.mxu0 0.0
  %v613 = vand.u32 %v24, 4294901760
  %614 = vmatpush1.msra.mxu0 %v613
  %615 = vmatprep.subr.mxu0 0.0
  %v616 = vand.u32 %v23, 4294901760
  %617 = vmatpush1.msra.mxu0 %v616
  %618 = vmatprep.subr.mxu0 0.0
  %v619 = vand.u32 %v22, 4294901760
  %620 = vmatpush1.msra.mxu0 %v619
  %621 = vmatprep.subr.mxu0 0.0
  %v622 = vand.u32 %v21, 4294901760
  %623 = vmatpush1.msra.mxu0 %v622
  %624 = vmatprep.subr.mxu0 0.0
  %v625 = vand.u32 %v20, 4294901760
  %626 = vmatpush1.msra.mxu0 %v625
  %627 = vmatprep.subr.mxu0 0.0
  %v628 = vand.u32 %v19, 4294901760
  %629 = vmatpush1.msra.mxu0 %v628
  %630 = vmatprep.subr.mxu0 0.0
  %v631 = vand.u32 %v18, 4294901760
  %632 = vmatpush1.msra.mxu0 %v631
  %633 = vmatprep.subr.mxu0 0.0
  %v634 = vand.u32 %v17, 4294901760
  %635 = vmatpush1.msra.mxu0 %v634
  %636 = vmatprep.subr.mxu0 0.0
  %v637 = vand.u32 %v16, 4294901760
  %638 = vmatpush1.msra.mxu0 %v637
  %639 = vmatprep.subr.mxu0 0.0
  %v640 = vand.u32 %v15, 4294901760
  %641 = vmatpush1.msra.mxu0 %v640
  %642 = vmatprep.subr.mxu0 0.0
  %v643 = vand.u32 %v14, 4294901760
  %644 = vmatpush1.msra.mxu0 %v643
  %645 = vmatprep.subr.mxu0 0.0
  %v646 = vand.u32 %v13, 4294901760
  %647 = vmatpush1.msra.mxu0 %v646
  %648 = vmatprep.subr.mxu0 0.0
  %v649 = vand.u32 %v12, 4294901760
  %650 = vmatpush1.msra.mxu0 %v649
  %651 = vmatprep.subr.mxu0 0.0
  %652 = vmatpush2.msra.mxu0 0.0
  %653 = vmatprep.subr.mxu0 0.0
  %654 = vmatpush2.msra.mxu0 0.0
  %655 = vmatprep.subr.mxu0 0.0
  %656 = vmatpush2.msra.mxu0 0.0
  %657 = vmatprep.subr.mxu0 0.0
  %658 = vmatpush2.msra.mxu0 0.0
  %659 = vmatprep.subr.mxu0 0.0
  %660 = vmatpush2.msra.mxu0 0.0
  %661 = vmatprep.subr.mxu0 0.0
  %662 = vmatpush2.msra.mxu0 0.0
  %663 = vmatprep.subr.mxu0 0.0
  %664 = vmatpush2.msra.mxu0 0.0
  %665 = vmatprep.subr.mxu0 0.0
  %666 = vmatpush2.msra.mxu0 0.0
  %667 = vmatprep.subr.mxu0 0.0
  %668 = vmatpush2.msra.mxu0 0.0
  %669 = vmatprep.subr.mxu0 0.0
  %670 = vmatpush2.msra.mxu0 0.0
  %671 = vmatprep.subr.mxu0 0.0
  %672 = vmatpush2.msra.mxu0 0.0
  %673 = vmatprep.subr.mxu0 0.0
  %674 = vmatpush2.msra.mxu0 0.0
  %675 = vmatprep.subr.mxu0 0.0
  %676 = vmatpush2.msra.mxu0 0.0
  %677 = vmatprep.subr.mxu0 0.0
  %678 = vmatpush2.msra.mxu0 0.0
  %679 = vmatprep.subr.mxu0 0.0
  %680 = vmatpush2.msra.mxu0 0.0
  %681 = vmatprep.subr.mxu0 0.0
  %682 = vmatpush2.msra.mxu0 0.0
  %683 = vmatprep.mubr.f32.mxu0 0.0
  %v684 = vand.u32 %v11, 4294901760
  %685 = vmatmul.mubr.f32.gmra.mxu0 %v684
  %v686 = vpop.f32.mrf.mxu0
  %v687 = vadd.f32 %v600, %v686
  %v688 = vpop.f32.mrf.mxu0
  %689 = vdwg.mxu0
  %v690 = vmax.f32 %v687, 0.0
  %v691 = vlaneseq
  %v692 = vshrl.u32 %v691, 7
  %v693 = vsub.s32 1, %v692
  %v694 = vrot.slane %v44, %v693
  %695 = vmatprep.subr.mxu0 0.0
  %v696 = vand.u32 %v43, 4294901760
  %697 = vmatpush1.msra.mxu0 %v696
  %698 = vmatprep.subr.mxu0 0.0
  %v699 = vand.u32 %v42, 4294901760
  %700 = vmatpush1.msra.mxu0 %v699
  %701 = vmatprep.subr.mxu0 0.0
  %v702 = vand.u32 %v41, 4294901760
  %703 = vmatpush1.msra.mxu0 %v702
  %704 = vmatprep.subr.mxu0 0.0
  %v705 = vand.u32 %v40, 4294901760
  %706 = vmatpush1.msra.mxu0 %v705
  %707 = vmatprep.subr.mxu0 0.0
  %v708 = vand.u32 %v39, 4294901760
  %709 = vmatpush1.msra.mxu0 %v708
  %710 = vmatprep.subr.mxu0 0.0
  %v711 = vand.u32 %v38, 4294901760
  %712 = vmatpush1.msra.mxu0 %v711
  %713 = vmatprep.subr.mxu0 0.0
  %v714 = vand.u32 %v37, 4294901760
  %715 = vmatpush1.msra.mxu0 %v714
  %716 = vmatprep.subr.mxu0 0.0
  %v717 = vand.u32 %v36, 4294901760
  %718 = vmatpush1.msra.mxu0 %v717
  %719 = vmatprep.subr.mxu0 0.0
  %v720 = vand.u32 %v35, 4294901760
  %721 = vmatpush1.msra.mxu0 %v720
  %722 = vmatprep.subr.mxu0 0.0
  %v723 = vand.u32 %v34, 4294901760
  %724 = vmatpush1.msra.mxu0 %v723
  %725 = vmatprep.subr.mxu0 0.0
  %v726 = vand.u32 %v33, 4294901760
  %727 = vmatpush1.msra.mxu0 %v726
  %728 = vmatprep.subr.mxu0 0.0
  %v729 = vand.u32 %v32, 4294901760
  %730 = vmatpush1.msra.mxu0 %v729
  %731 = vmatprep.subr.mxu0 0.0
  %v732 = vand.u32 %v31, 4294901760
  %733 = vmatpush1.msra.mxu0 %v732
  %734 = vmatprep.subr.mxu0 0.0
  %v735 = vand.u32 %v30, 4294901760
  %736 = vmatpush1.msra.mxu0 %v735
  %737 = vmatprep.subr.mxu0 0.0
  %v738 = vand.u32 %v29, 4294901760
  %739 = vmatpush1.msra.mxu0 %v738
  %740 = vmatprep.subr.mxu0 0.0
  %v741 = vand.u32 %v28, 4294901760
  %742 = vmatpush1.msra.mxu0 %v741
  %743 = vmatprep.subr.mxu0 0.0
  %744 = vmatpush2.msra.mxu0 0.0
  %745 = vmatprep.subr.mxu0 0.0
  %746 = vmatpush2.msra.mxu0 0.0
  %747 = vmatprep.subr.mxu0 0.0
  %748 = vmatpush2.msra.mxu0 0.0
  %749 = vmatprep.subr.mxu0 0.0
  %750 = vmatpush2.msra.mxu0 0.0
  %751 = vmatprep.subr.mxu0 0.0
  %752 = vmatpush2.msra.mxu0 0.0
  %753 = vmatprep.subr.mxu0 0.0
  %754 = vmatpush2.msra.mxu0 0.0
  %755 = vmatprep.subr.mxu0 0.0
  %756 = vmatpush2.msra.mxu0 0.0
  %757 = vmatprep.subr.mxu0 0.0
  %758 = vmatpush2.msra.mxu0 0.0
  %759 = vmatprep.subr.mxu0 0.0
  %760 = vmatpush2.msra.mxu0 0.0
  %761 = vmatprep.subr.mxu0 0.0
  %762 = vmatpush2.msra.mxu0 0.0
  %763 = vmatprep.subr.mxu0 0.0
  %764 = vmatpush2.msra.mxu0 0.0
  %765 = vmatprep.subr.mxu0 0.0
  %766 = vmatpush2.msra.mxu0 0.0
  %767 = vmatprep.subr.mxu0 0.0
  %768 = vmatpush2.msra.mxu0 0.0
  %769 = vmatprep.subr.mxu0 0.0
  %770 = vmatpush2.msra.mxu0 0.0
  %771 = vmatprep.subr.mxu0 0.0
  %772 = vmatpush2.msra.mxu0 0.0
  %773 = vmatprep.subr.mxu0 0.0
  %774 = vmatpush2.msra.mxu0 0.0
  %775 = vmatprep.mubr.f32.mxu0 0.0
  %v776 = vand.u32 %v690, 4294901760
  %v777 = vsub.f32 %v690, %v776
  %v778 = vand.u32 %v777, 4294901760
  %v779 = vsub.f32 %v777, %v778
  %v780 = vand.u32 %v779, 4294901760
  %781 = vmatmul.mubr.f32.gmra.mxu0 %v780
  %v782 = vpop.f32.mrf.mxu0
  %v783 = vadd.f32 %v694, %v782
  %v784 = vpop.f32.mrf.mxu0
  %785 = vdwg.mxu0
  %786 = vmatprep.subr.mxu0 0.0
  %v787 = vand.u32 %v43, 4294901760
  %v788 = vsub.f32 %v43, %v787
  %v789 = vand.u32 %v788, 4294901760
  %v790 = vsub.f32 %v788, %v789
  %v791 = vand.u32 %v790, 4294901760
  %792 = vmatpush1.msra.mxu0 %v791
  %793 = vmatprep.subr.mxu0 0.0
  %v794 = vand.u32 %v42, 4294901760
  %v795 = vsub.f32 %v42, %v794
  %v796 = vand.u32 %v795, 4294901760
  %v797 = vsub.f32 %v795, %v796
  %v798 = vand.u32 %v797, 4294901760
  %799 = vmatpush1.msra.mxu0 %v798
  %800 = vmatprep.subr.mxu0 0.0
  %v801 = vand.u32 %v41, 4294901760
  %v802 = vsub.f32 %v41, %v801
  %v803 = vand.u32 %v802, 4294901760
  %v804 = vsub.f32 %v802, %v803
  %v805 = vand.u32 %v804, 4294901760
  %806 = vmatpush1.msra.mxu0 %v805
  %807 = vmatprep.subr.mxu0 0.0
  %v808 = vand.u32 %v40, 4294901760
  %v809 = vsub.f32 %v40, %v808
  %v810 = vand.u32 %v809, 4294901760
  %v811 = vsub.f32 %v809, %v810
  %v812 = vand.u32 %v811, 4294901760
  %813 = vmatpush1.msra.mxu0 %v812
  %814 = vmatprep.subr.mxu0 0.0
  %v815 = vand.u32 %v39, 4294901760
  %v816 = vsub.f32 %v39, %v815
  %v817 = vand.u32 %v816, 4294901760
  %v818 = vsub.f32 %v816, %v817
  %v819 = vand.u32 %v818, 4294901760
  %820 = vmatpush1.msra.mxu0 %v819
  %821 = vmatprep.subr.mxu0 0.0
  %v822 = vand.u32 %v38, 4294901760
  %v823 = vsub.f32 %v38, %v822
  %v824 = vand.u32 %v823, 4294901760
  %v825 = vsub.f32 %v823, %v824
  %v826 = vand.u32 %v825, 4294901760
  %827 = vmatpush1.msra.mxu0 %v826
  %828 = vmatprep.subr.mxu0 0.0
  %v829 = vand.u32 %v37, 4294901760
  %v830 = vsub.f32 %v37, %v829
  %v831 = vand.u32 %v830, 4294901760
  %v832 = vsub.f32 %v830, %v831
  %v833 = vand.u32 %v832, 4294901760
  %834 = vmatpush1.msra.mxu0 %v833
  %835 = vmatprep.subr.mxu0 0.0
  %v836 = vand.u32 %v36, 4294901760
  %v837 = vsub.f32 %v36, %v836
  %v838 = vand.u32 %v837, 4294901760
  %v839 = vsub.f32 %v837, %v838
  %v840 = vand.u32 %v839, 4294901760
  %841 = vmatpush1.msra.mxu0 %v840
  %842 = vmatprep.subr.mxu0 0.0
  %v843 = vand.u32 %v35, 4294901760
  %v844 = vsub.f32 %v35, %v843
  %v845 = vand.u32 %v844, 4294901760
  %v846 = vsub.f32 %v844, %v845
  %v847 = vand.u32 %v846, 4294901760
  %848 = vmatpush1.msra.mxu0 %v847
  %849 = vmatprep.subr.mxu0 0.0
  %v850 = vand.u32 %v34, 4294901760
  %v851 = vsub.f32 %v34, %v850
  %v852 = vand.u32 %v851, 4294901760
  %v853 = vsub.f32 %v851, %v852
  %v854 = vand.u32 %v853, 4294901760
  %855 = vmatpush1.msra.mxu0 %v854
  %856 = vmatprep.subr.mxu0 0.0
  %v857 = vand.u32 %v33, 4294901760
  %v858 = vsub.f32 %v33, %v857
  %v859 = vand.u32 %v858, 4294901760
  %v860 = vsub.f32 %v858, %v859
  %v861 = vand.u32 %v860, 4294901760
  %862 = vmatpush1.msra.mxu0 %v861
  %863 = vmatprep.subr.mxu0 0.0
  %v864 = vand.u32 %v32, 4294901760
  %v865 = vsub.f32 %v32, %v864
  %v866 = vand.u32 %v865, 4294901760
  %v867 = vsub.f32 %v865, %v866
  %v868 = vand.u32 %v867, 4294901760
  %869 = vmatpush1.msra.mxu0 %v868
  %870 = vmatprep.subr.mxu0 0.0
  %v871 = vand.u32 %v31, 4294901760
  %v872 = vsub.f32 %v31, %v871
  %v873 = vand.u32 %v872, 4294901760
  %v874 = vsub.f32 %v872, %v873
  %v875 = vand.u32 %v874, 4294901760
  %876 = vmatpush1.msra.mxu0 %v875
  %877 = vmatprep.subr.mxu0 0.0
  %v878 = vand.u32 %v30, 4294901760
  %v879 = vsub.f32 %v30, %v878
  %v880 = vand.u32 %v879, 4294901760
  %v881 = vsub.f32 %v879, %v880
  %v882 = vand.u32 %v881, 4294901760
  %883 = vmatpush1.msra.mxu0 %v882
  %884 = vmatprep.subr.mxu0 0.0
  %v885 = vand.u32 %v29, 4294901760
  %v886 = vsub.f32 %v29, %v885
  %v887 = vand.u32 %v886, 4294901760
  %v888 = vsub.f32 %v886, %v887
  %v889 = vand.u32 %v888, 4294901760
  %890 = vmatpush1.msra.mxu0 %v889
  %891 = vmatprep.subr.mxu0 0.0
  %v892 = vand.u32 %v28, 4294901760
  %v893 = vsub.f32 %v28, %v892
  %v894 = vand.u32 %v893, 4294901760
  %v895 = vsub.f32 %v893, %v894
  %v896 = vand.u32 %v895, 4294901760
  %897 = vmatpush1.msra.mxu0 %v896
  %898 = vmatprep.subr.mxu0 0.0
  %899 = vmatpush2.msra.mxu0 0.0
  %900 = vmatprep.subr.mxu0 0.0
  %901 = vmatpush2.msra.mxu0 0.0
  %902 = vmatprep.subr.mxu0 0.0
  %903 = vmatpush2.msra.mxu0 0.0
  %904 = vmatprep.subr.mxu0 0.0
  %905 = vmatpush2.msra.mxu0 0.0
  %906 = vmatprep.subr.mxu0 0.0
  %907 = vmatpush2.msra.mxu0 0.0
  %908 = vmatprep.subr.mxu0 0.0
  %909 = vmatpush2.msra.mxu0 0.0
  %910 = vmatprep.subr.mxu0 0.0
  %911 = vmatpush2.msra.mxu0 0.0
  %912 = vmatprep.subr.mxu0 0.0
  %913 = vmatpush2.msra.mxu0 0.0
  %914 = vmatprep.subr.mxu0 0.0
  %915 = vmatpush2.msra.mxu0 0.0
  %916 = vmatprep.subr.mxu0 0.0
  %917 = vmatpush2.msra.mxu0 0.0
  %918 = vmatprep.subr.mxu0 0.0
  %919 = vmatpush2.msra.mxu0 0.0
  %920 = vmatprep.subr.mxu0 0.0
  %921 = vmatpush2.msra.mxu0 0.0
  %922 = vmatprep.subr.mxu0 0.0
  %923 = vmatpush2.msra.mxu0 0.0
  %924 = vmatprep.subr.mxu0 0.0
  %925 = vmatpush2.msra.mxu0 0.0
  %926 = vmatprep.subr.mxu0 0.0
  %927 = vmatpush2.msra.mxu0 0.0
  %928 = vmatprep.subr.mxu0 0.0
  %929 = vmatpush2.msra.mxu0 0.0
  %930 = vmatprep.mubr.f32.mxu0 0.0
  %v931 = vand.u32 %v690, 4294901760
  %932 = vmatmul.mubr.f32.gmra.mxu0 %v931
  %v933 = vpop.f32.mrf.mxu0
  %v934 = vadd.f32 %v783, %v933
  %v935 = vpop.f32.mrf.mxu0
  %936 = vdwg.mxu0
  %937 = vmatprep.subr.mxu0 0.0
  %v938 = vand.u32 %v43, 4294901760
  %v939 = vsub.f32 %v43, %v938
  %940 = vmatpush1.msra.mxu0 %v939
  %941 = vmatprep.subr.mxu0 0.0
  %v942 = vand.u32 %v42, 4294901760
  %v943 = vsub.f32 %v42, %v942
  %944 = vmatpush1.msra.mxu0 %v943
  %945 = vmatprep.subr.mxu0 0.0
  %v946 = vand.u32 %v41, 4294901760
  %v947 = vsub.f32 %v41, %v946
  %948 = vmatpush1.msra.mxu0 %v947
  %949 = vmatprep.subr.mxu0 0.0
  %v950 = vand.u32 %v40, 4294901760
  %v951 = vsub.f32 %v40, %v950
  %952 = vmatpush1.msra.mxu0 %v951
  %953 = vmatprep.subr.mxu0 0.0
  %v954 = vand.u32 %v39, 4294901760
  %v955 = vsub.f32 %v39, %v954
  %956 = vmatpush1.msra.mxu0 %v955
  %957 = vmatprep.subr.mxu0 0.0
  %v958 = vand.u32 %v38, 4294901760
  %v959 = vsub.f32 %v38, %v958
  %960 = vmatpush1.msra.mxu0 %v959
  %961 = vmatprep.subr.mxu0 0.0
  %v962 = vand.u32 %v37, 4294901760
  %v963 = vsub.f32 %v37, %v962
  %964 = vmatpush1.msra.mxu0 %v963
  %965 = vmatprep.subr.mxu0 0.0
  %v966 = vand.u32 %v36, 4294901760
  %v967 = vsub.f32 %v36, %v966
  %968 = vmatpush1.msra.mxu0 %v967
  %969 = vmatprep.subr.mxu0 0.0
  %v970 = vand.u32 %v35, 4294901760
  %v971 = vsub.f32 %v35, %v970
  %972 = vmatpush1.msra.mxu0 %v971
  %973 = vmatprep.subr.mxu0 0.0
  %v974 = vand.u32 %v34, 4294901760
  %v975 = vsub.f32 %v34, %v974
  %976 = vmatpush1.msra.mxu0 %v975
  %977 = vmatprep.subr.mxu0 0.0
  %v978 = vand.u32 %v33, 4294901760
  %v979 = vsub.f32 %v33, %v978
  %980 = vmatpush1.msra.mxu0 %v979
  %981 = vmatprep.subr.mxu0 0.0
  %v982 = vand.u32 %v32, 4294901760
  %v983 = vsub.f32 %v32, %v982
  %984 = vmatpush1.msra.mxu0 %v983
  %985 = vmatprep.subr.mxu0 0.0
  %v986 = vand.u32 %v31, 4294901760
  %v987 = vsub.f32 %v31, %v986
  %988 = vmatpush1.msra.mxu0 %v987
  %989 = vmatprep.subr.mxu0 0.0
  %v990 = vand.u32 %v30, 4294901760
  %v991 = vsub.f32 %v30, %v990
  %992 = vmatpush1.msra.mxu0 %v991
  %993 = vmatprep.subr.mxu0 0.0
  %v994 = vand.u32 %v29, 4294901760
  %v995 = vsub.f32 %v29, %v994
  %996 = vmatpush1.msra.mxu0 %v995
  %997 = vmatprep.subr.mxu0 0.0
  %v998 = vand.u32 %v28, 4294901760
  %v999 = vsub.f32 %v28, %v998
  %1000 = vmatpush1.msra.mxu0 %v999
  %1001 = vmatprep.subr.mxu0 0.0
  %1002 = vmatpush2.msra.mxu0 0.0
  %1003 = vmatprep.subr.mxu0 0.0
  %1004 = vmatpush2.msra.mxu0 0.0
  %1005 = vmatprep.subr.mxu0 0.0
  %1006 = vmatpush2.msra.mxu0 0.0
  %1007 = vmatprep.subr.mxu0 0.0
  %1008 = vmatpush2.msra.mxu0 0.0
  %1009 = vmatprep.subr.mxu0 0.0
  %1010 = vmatpush2.msra.mxu0 0.0
  %1011 = vmatprep.subr.mxu0 0.0
  %1012 = vmatpush2.msra.mxu0 0.0
  %1013 = vmatprep.subr.mxu0 0.0
  %1014 = vmatpush2.msra.mxu0 0.0
  %1015 = vmatprep.subr.mxu0 0.0
  %1016 = vmatpush2.msra.mxu0 0.0
  %1017 = vmatprep.subr.mxu0 0.0
  %1018 = vmatpush2.msra.mxu0 0.0
  %1019 = vmatprep.subr.mxu0 0.0
  %1020 = vmatpush2.msra.mxu0 0.0
  %1021 = vmatprep.subr.mxu0 0.0
  %1022 = vmatpush2.msra.mxu0 0.0
  %1023 = vmatprep.subr.mxu0 0.0
  %1024 = vmatpush2.msra.mxu0 0.0
  %1025 = vmatprep.subr.mxu0 0.0
  %1026 = vmatpush2.msra.mxu0 0.0
  %1027 = vmatprep.subr.mxu0 0.0
  %1028 = vmatpush2.msra.mxu0 0.0
  %1029 = vmatprep.subr.mxu0 0.0
  %1030 = vmatpush2.msra.mxu0 0.0
  %1031 = vmatprep.subr.mxu0 0.0
  %1032 = vmatpush2.msra.mxu0 0.0
  %1033 = vmatprep.mubr.f32.mxu0 0.0
  %v1034 = vand.u32 %v690, 4294901760
  %v1035 = vsub.f32 %v690, %v1034
  %1036 = vmatmul.mubr.f32.gmra.mxu0 %v1035
  %v1037 = vpop.f32.mrf.mxu0
  %v1038 = vadd.f32 %v934, %v1037
  %v1039 = vpop.f32.mrf.mxu0
  %1040 = vdwg.mxu0
  %1041 = vmatprep.subr.mxu0 0.0
  %v1042 = vand.u32 %v43, 4294901760
  %1043 = vmatpush1.msra.mxu0 %v1042
  %1044 = vmatprep.subr.mxu0 0.0
  %v1045 = vand.u32 %v42, 4294901760
  %1046 = vmatpush1.msra.mxu0 %v1045
  %1047 = vmatprep.subr.mxu0 0.0
  %v1048 = vand.u32 %v41, 4294901760
  %1049 = vmatpush1.msra.mxu0 %v1048
  %1050 = vmatprep.subr.mxu0 0.0
  %v1051 = vand.u32 %v40, 4294901760
  %1052 = vmatpush1.msra.mxu0 %v1051
  %1053 = vmatprep.subr.mxu0 0.0
  %v1054 = vand.u32 %v39, 4294901760
  %1055 = vmatpush1.msra.mxu0 %v1054
  %1056 = vmatprep.subr.mxu0 0.0
  %v1057 = vand.u32 %v38, 4294901760
  %1058 = vmatpush1.msra.mxu0 %v1057
  %1059 = vmatprep.subr.mxu0 0.0
  %v1060 = vand.u32 %v37, 4294901760
  %1061 = vmatpush1.msra.mxu0 %v1060
  %1062 = vmatprep.subr.mxu0 0.0
  %v1063 = vand.u32 %v36, 4294901760
  %1064 = vmatpush1.msra.mxu0 %v1063
  %1065 = vmatprep.subr.mxu0 0.0
  %v1066 = vand.u32 %v35, 4294901760
  %1067 = vmatpush1.msra.mxu0 %v1066
  %1068 = vmatprep.subr.mxu0 0.0
  %v1069 = vand.u32 %v34, 4294901760
  %1070 = vmatpush1.msra.mxu0 %v1069
  %1071 = vmatprep.subr.mxu0 0.0
  %v1072 = vand.u32 %v33, 4294901760
  %1073 = vmatpush1.msra.mxu0 %v1072
  %1074 = vmatprep.subr.mxu0 0.0
  %v1075 = vand.u32 %v32, 4294901760
  %1076 = vmatpush1.msra.mxu0 %v1075
  %1077 = vmatprep.subr.mxu0 0.0
  %v1078 = vand.u32 %v31, 4294901760
  %1079 = vmatpush1.msra.mxu0 %v1078
  %1080 = vmatprep.subr.mxu0 0.0
  %v1081 = vand.u32 %v30, 4294901760
  %1082 = vmatpush1.msra.mxu0 %v1081
  %1083 = vmatprep.subr.mxu0 0.0
  %v1084 = vand.u32 %v29, 4294901760
  %1085 = vmatpush1.msra.mxu0 %v1084
  %1086 = vmatprep.subr.mxu0 0.0
  %v1087 = vand.u32 %v28, 4294901760
  %1088 = vmatpush1.msra.mxu0 %v1087
  %1089 = vmatprep.subr.mxu0 0.0
  %1090 = vmatpush2.msra.mxu0 0.0
  %1091 = vmatprep.subr.mxu0 0.0
  %1092 = vmatpush2.msra.mxu0 0.0
  %1093 = vmatprep.subr.mxu0 0.0
  %1094 = vmatpush2.msra.mxu0 0.0
  %1095 = vmatprep.subr.mxu0 0.0
  %1096 = vmatpush2.msra.mxu0 0.0
  %1097 = vmatprep.subr.mxu0 0.0
  %1098 = vmatpush2.msra.mxu0 0.0
  %1099 = vmatprep.subr.mxu0 0.0
  %1100 = vmatpush2.msra.mxu0 0.0
  %1101 = vmatprep.subr.mxu0 0.0
  %1102 = vmatpush2.msra.mxu0 0.0
  %1103 = vmatprep.subr.mxu0 0.0
  %1104 = vmatpush2.msra.mxu0 0.0
  %1105 = vmatprep.subr.mxu0 0.0
  %1106 = vmatpush2.msra.mxu0 0.0
  %1107 = vmatprep.subr.mxu0 0.0
  %1108 = vmatpush2.msra.mxu0 0.0
  %1109 = vmatprep.subr.mxu0 0.0
  %1110 = vmatpush2.msra.mxu0 0.0
  %1111 = vmatprep.subr.mxu0 0.0
  %1112 = vmatpush2.msra.mxu0 0.0
  %1113 = vmatprep.subr.mxu0 0.0
  %1114 = vmatpush2.msra.mxu0 0.0
  %1115 = vmatprep.subr.mxu0 0.0
  %1116 = vmatpush2.msra.mxu0 0.0
  %1117 = vmatprep.subr.mxu0 0.0
  %1118 = vmatpush2.msra.mxu0 0.0
  %1119 = vmatprep.subr.mxu0 0.0
  %1120 = vmatpush2.msra.mxu0 0.0
  %1121 = vmatprep.mubr.f32.mxu0 0.0
  %v1122 = vand.u32 %v690, 4294901760
  %v1123 = vsub.f32 %v690, %v1122
  %v1124 = vand.u32 %v1123, 4294901760
  %1125 = vmatmul.mubr.f32.gmra.mxu0 %v1124
  %v1126 = vpop.f32.mrf.mxu0
  %v1127 = vadd.f32 %v1038, %v1126
  %v1128 = vpop.f32.mrf.mxu0
  %1129 = vdwg.mxu0
  %1130 = vmatprep.subr.mxu0 0.0
  %v1131 = vand.u32 %v43, 4294901760
  %v1132 = vsub.f32 %v43, %v1131
  %v1133 = vand.u32 %v1132, 4294901760
  %1134 = vmatpush1.msra.mxu0 %v1133
  %1135 = vmatprep.subr.mxu0 0.0
  %v1136 = vand.u32 %v42, 4294901760
  %v1137 = vsub.f32 %v42, %v1136
  %v1138 = vand.u32 %v1137, 4294901760
  %1139 = vmatpush1.msra.mxu0 %v1138
  %1140 = vmatprep.subr.mxu0 0.0
  %v1141 = vand.u32 %v41, 4294901760
  %v1142 = vsub.f32 %v41, %v1141
  %v1143 = vand.u32 %v1142, 4294901760
  %1144 = vmatpush1.msra.mxu0 %v1143
  %1145 = vmatprep.subr.mxu0 0.0
  %v1146 = vand.u32 %v40, 4294901760
  %v1147 = vsub.f32 %v40, %v1146
  %v1148 = vand.u32 %v1147, 4294901760
  %1149 = vmatpush1.msra.mxu0 %v1148
  %1150 = vmatprep.subr.mxu0 0.0
  %v1151 = vand.u32 %v39, 4294901760
  %v1152 = vsub.f32 %v39, %v1151
  %v1153 = vand.u32 %v1152, 4294901760
  %1154 = vmatpush1.msra.mxu0 %v1153
  %1155 = vmatprep.subr.mxu0 0.0
  %v1156 = vand.u32 %v38, 4294901760
  %v1157 = vsub.f32 %v38, %v1156
  %v1158 = vand.u32 %v1157, 4294901760
  %1159 = vmatpush1.msra.mxu0 %v1158
  %1160 = vmatprep.subr.mxu0 0.0
  %v1161 = vand.u32 %v37, 4294901760
  %v1162 = vsub.f32 %v37, %v1161
  %v1163 = vand.u32 %v1162, 4294901760
  %1164 = vmatpush1.msra.mxu0 %v1163
  %1165 = vmatprep.subr.mxu0 0.0
  %v1166 = vand.u32 %v36, 4294901760
  %v1167 = vsub.f32 %v36, %v1166
  %v1168 = vand.u32 %v1167, 4294901760
  %1169 = vmatpush1.msra.mxu0 %v1168
  %1170 = vmatprep.subr.mxu0 0.0
  %v1171 = vand.u32 %v35, 4294901760
  %v1172 = vsub.f32 %v35, %v1171
  %v1173 = vand.u32 %v1172, 4294901760
  %1174 = vmatpush1.msra.mxu0 %v1173
  %1175 = vmatprep.subr.mxu0 0.0
  %v1176 = vand.u32 %v34, 4294901760
  %v1177 = vsub.f32 %v34, %v1176
  %v1178 = vand.u32 %v1177, 4294901760
  %1179 = vmatpush1.msra.mxu0 %v1178
  %1180 = vmatprep.subr.mxu0 0.0
  %v1181 = vand.u32 %v33, 4294901760
  %v1182 = vsub.f32 %v33, %v1181
  %v1183 = vand.u32 %v1182, 4294901760
  %1184 = vmatpush1.msra.mxu0 %v1183
  %1185 = vmatprep.subr.mxu0 0.0
  %v1186 = vand.u32 %v32, 4294901760
  %v1187 = vsub.f32 %v32, %v1186
  %v1188 = vand.u32 %v1187, 4294901760
  %1189 = vmatpush1.msra.mxu0 %v1188
  %1190 = vmatprep.subr.mxu0 0.0
  %v1191 = vand.u32 %v31, 4294901760
  %v1192 = vsub.f32 %v31, %v1191
  %v1193 = vand.u32 %v1192, 4294901760
  %1194 = vmatpush1.msra.mxu0 %v1193
  %1195 = vmatprep.subr.mxu0 0.0
  %v1196 = vand.u32 %v30, 4294901760
  %v1197 = vsub.f32 %v30, %v1196
  %v1198 = vand.u32 %v1197, 4294901760
  %1199 = vmatpush1.msra.mxu0 %v1198
  %1200 = vmatprep.subr.mxu0 0.0
  %v1201 = vand.u32 %v29, 4294901760
  %v1202 = vsub.f32 %v29, %v1201
  %v1203 = vand.u32 %v1202, 4294901760
  %1204 = vmatpush1.msra.mxu0 %v1203
  %1205 = vmatprep.subr.mxu0 0.0
  %v1206 = vand.u32 %v28, 4294901760
  %v1207 = vsub.f32 %v28, %v1206
  %v1208 = vand.u32 %v1207, 4294901760
  %1209 = vmatpush1.msra.mxu0 %v1208
  %1210 = vmatprep.subr.mxu0 0.0
  %1211 = vmatpush2.msra.mxu0 0.0
  %1212 = vmatprep.subr.mxu0 0.0
  %1213 = vmatpush2.msra.mxu0 0.0
  %1214 = vmatprep.subr.mxu0 0.0
  %1215 = vmatpush2.msra.mxu0 0.0
  %1216 = vmatprep.subr.mxu0 0.0
  %1217 = vmatpush2.msra.mxu0 0.0
  %1218 = vmatprep.subr.mxu0 0.0
  %1219 = vmatpush2.msra.mxu0 0.0
  %1220 = vmatprep.subr.mxu0 0.0
  %1221 = vmatpush2.msra.mxu0 0.0
  %1222 = vmatprep.subr.mxu0 0.0
  %1223 = vmatpush2.msra.mxu0 0.0
  %1224 = vmatprep.subr.mxu0 0.0
  %1225 = vmatpush2.msra.mxu0 0.0
  %1226 = vmatprep.subr.mxu0 0.0
  %1227 = vmatpush2.msra.mxu0 0.0
  %1228 = vmatprep.subr.mxu0 0.0
  %1229 = vmatpush2.msra.mxu0 0.0
  %1230 = vmatprep.subr.mxu0 0.0
  %1231 = vmatpush2.msra.mxu0 0.0
  %1232 = vmatprep.subr.mxu0 0.0
  %1233 = vmatpush2.msra.mxu0 0.0
  %1234 = vmatprep.subr.mxu0 0.0
  %1235 = vmatpush2.msra.mxu0 0.0
  %1236 = vmatprep.subr.mxu0 0.0
  %1237 = vmatpush2.msra.mxu0 0.0
  %1238 = vmatprep.subr.mxu0 0.0
  %1239 = vmatpush2.msra.mxu0 0.0
  %1240 = vmatprep.subr.mxu0 0.0
  %1241 = vmatpush2.msra.mxu0 0.0
  %1242 = vmatprep.mubr.f32.mxu0 0.0
  %v1243 = vand.u32 %v690, 4294901760
  %1244 = vmatmul.mubr.f32.gmra.mxu0 %v1243
  %v1245 = vpop.f32.mrf.mxu0
  %v1246 = vadd.f32 %v1127, %v1245
  %v1247 = vpop.f32.mrf.mxu0
  %1248 = vdwg.mxu0
  %1249 = vmatprep.subr.mxu0 0.0
  %v1250 = vand.u32 %v43, 4294901760
  %1251 = vmatpush1.msra.mxu0 %v1250
  %1252 = vmatprep.subr.mxu0 0.0
  %v1253 = vand.u32 %v42, 4294901760
  %1254 = vmatpush1.msra.mxu0 %v1253
  %1255 = vmatprep.subr.mxu0 0.0
  %v1256 = vand.u32 %v41, 4294901760
  %1257 = vmatpush1.msra.mxu0 %v1256
  %1258 = vmatprep.subr.mxu0 0.0
  %v1259 = vand.u32 %v40, 4294901760
  %1260 = vmatpush1.msra.mxu0 %v1259
  %1261 = vmatprep.subr.mxu0 0.0
  %v1262 = vand.u32 %v39, 4294901760
  %1263 = vmatpush1.msra.mxu0 %v1262
  %1264 = vmatprep.subr.mxu0 0.0
  %v1265 = vand.u32 %v38, 4294901760
  %1266 = vmatpush1.msra.mxu0 %v1265
  %1267 = vmatprep.subr.mxu0 0.0
  %v1268 = vand.u32 %v37, 4294901760
  %1269 = vmatpush1.msra.mxu0 %v1268
  %1270 = vmatprep.subr.mxu0 0.0
  %v1271 = vand.u32 %v36, 4294901760
  %1272 = vmatpush1.msra.mxu0 %v1271
  %1273 = vmatprep.subr.mxu0 0.0
  %v1274 = vand.u32 %v35, 4294901760
  %1275 = vmatpush1.msra.mxu0 %v1274
  %1276 = vmatprep.subr.mxu0 0.0
  %v1277 = vand.u32 %v34, 4294901760
  %1278 = vmatpush1.msra.mxu0 %v1277
  %1279 = vmatprep.subr.mxu0 0.0
  %v1280 = vand.u32 %v33, 4294901760
  %1281 = vmatpush1.msra.mxu0 %v1280
  %1282 = vmatprep.subr.mxu0 0.0
  %v1283 = vand.u32 %v32, 4294901760
  %1284 = vmatpush1.msra.mxu0 %v1283
  %1285 = vmatprep.subr.mxu0 0.0
  %v1286 = vand.u32 %v31, 4294901760
  %1287 = vmatpush1.msra.mxu0 %v1286
  %1288 = vmatprep.subr.mxu0 0.0
  %v1289 = vand.u32 %v30, 4294901760
  %1290 = vmatpush1.msra.mxu0 %v1289
  %1291 = vmatprep.subr.mxu0 0.0
  %v1292 = vand.u32 %v29, 4294901760
  %1293 = vmatpush1.msra.mxu0 %v1292
  %1294 = vmatprep.subr.mxu0 0.0
  %v1295 = vand.u32 %v28, 4294901760
  %1296 = vmatpush1.msra.mxu0 %v1295
  %1297 = vmatprep.subr.mxu0 0.0
  %1298 = vmatpush2.msra.mxu0 0.0
  %1299 = vmatprep.subr.mxu0 0.0
  %1300 = vmatpush2.msra.mxu0 0.0
  %1301 = vmatprep.subr.mxu0 0.0
  %1302 = vmatpush2.msra.mxu0 0.0
  %1303 = vmatprep.subr.mxu0 0.0
  %1304 = vmatpush2.msra.mxu0 0.0
  %1305 = vmatprep.subr.mxu0 0.0
  %1306 = vmatpush2.msra.mxu0 0.0
  %1307 = vmatprep.subr.mxu0 0.0
  %1308 = vmatpush2.msra.mxu0 0.0
  %1309 = vmatprep.subr.mxu0 0.0
  %1310 = vmatpush2.msra.mxu0 0.0
  %1311 = vmatprep.subr.mxu0 0.0
  %1312 = vmatpush2.msra.mxu0 0.0
  %1313 = vmatprep.subr.mxu0 0.0
  %1314 = vmatpush2.msra.mxu0 0.0
  %1315 = vmatprep.subr.mxu0 0.0
  %1316 = vmatpush2.msra.mxu0 0.0
  %1317 = vmatprep.subr.mxu0 0.0
  %1318 = vmatpush2.msra.mxu0 0.0
  %1319 = vmatprep.subr.mxu0 0.0
  %1320 = vmatpush2.msra.mxu0 0.0
  %1321 = vmatprep.subr.mxu0 0.0
  %1322 = vmatpush2.msra.mxu0 0.0
  %1323 = vmatprep.subr.mxu0 0.0
  %1324 = vmatpush2.msra.mxu0 0.0
  %1325 = vmatprep.subr.mxu0 0.0
  %1326 = vmatpush2.msra.mxu0 0.0
  %1327 = vmatprep.subr.mxu0 0.0
  %1328 = vmatpush2.msra.mxu0 0.0
  %1329 = vmatprep.mubr.f32.mxu0 0.0
  %v1330 = vand.u32 %v690, 4294901760
  %1331 = vmatmul.mubr.f32.gmra.mxu0 %v1330
  %v1332 = vpop.f32.mrf.mxu0
  %v1333 = vadd.f32 %v1246, %v1332
  %v1334 = vpop.f32.mrf.mxu0
  %1335 = vdwg.mxu0
  %v1336 = vmax.f32 %v1333, 0.0
  %v1337 = vlaneseq
  %v1338 = vshrl.u32 %v1337, 7
  %v1339 = vsub.s32 2, %v1338
  %v1340 = vrot.slane %v44, %v1339
  %v1341 = vmul.f32 %v1336, %v1340
  %1342 = vadd.xlane.f32.xlu0 %v1341
  %v1343 = vpop.xlane.xlu0 %1342
  %v1344 = vlaneseq
  %v1345 = vshrl.u32 %v1344, 7
  %v1346 = vsub.s32 3, %v1345
  %v1347 = vrot.slane %v44, %v1346
  %v1348 = vadd.f32 %v1343, %v1347
  %1349 = vst [vmem:[%s2] sm:$0xff] %v1348
  // Predicated region
  $region10: #{mlp_forward.1} parent=0 // pred_check
    _
  $region11: #{mlp_forward.1} parent=0 // pred_check_branch
    %1351 = sbr.rel (0) target = $region13
  $region12: #{mlp_forward.1} parent=0 // pred_region
    _
  $region13: #{mlp_forward.1} parent=0 // pred_fallthru
    _
  // Predicated region
  $region14: #{mlp_forward.1} parent=0 // pred_check
    _
  $region15: #{mlp_forward.1} parent=0 // pred_check_branch
    %1353 = sbr.rel (0) target = $region17
  $region16: #{mlp_forward.1} parent=0 // pred_region
    _
  $region17: #{mlp_forward.1} parent=0 // pred_fallthru
    _

</llo_original>
